<compile_context>
chip_gen: v6e
topology: v6e:2x2x1
jax: 0.10.0
libtpu: 0.0.40
codegen_flags: <defaults>
</compile_context>

<pallas_src>
import functools

import jax
import jax.numpy as jnp
from jax.experimental import pallas as pl
from jax.experimental.pallas import tpu as pltpu

F_FEAT = 128        # stand-in for EfficientNet-B0 in_features (=1280)
NUM_CLASSES = 8
NC_PAD = 128        # lane-dense padded class dimension


def _round_up(x, m):
    return ((x + m - 1) // m) * m


# ------------------------------ Pallas kernel ------------------------------- #

def fused_forward_kernel(p_ref, w_stem_ref, b_stem_ref, w_fc_ref, b_fc_ref,
                         o_ref, acc_ref, *, n_rows, tile_rows):
    """Grid step (b, l): stem conv (im2col matmul, bf16 in / f32 acc) + SiLU on a
    (TL, K) patch tile, accumulate the per-batch-element pooling sum in VMEM; on the
    last row tile finish the mean, apply fc + bias + sigmoid, store lane-dense output."""
    l = pl.program_id(1)

    @pl.when(l == 0)
    def _():
        acc_ref[...] = jnp.zeros_like(acc_ref)

    # conv-as-matmul + folded-BN bias + SiLU (all on the f32 accumulator)
    acc = jnp.dot(p_ref[0], w_stem_ref[...], preferred_element_type=jnp.float32)
    acc = acc + b_stem_ref[...]                        # (TL, F) + (1, F)
    h = acc * jax.nn.sigmoid(acc)                      # SiLU

    # mask zero-padded rows: SiLU(bias) != 0, so padding must not leak into the pool
    row = l * tile_rows + jax.lax.broadcasted_iota(jnp.int32, (tile_rows, F_FEAT), 0)
    h = jnp.where(row < n_rows, h, 0.0)

    acc_ref[...] += jnp.sum(h, axis=0, keepdims=True)  # running pool sum, (1, F)

    @pl.when(l == pl.num_programs(1) - 1)
    def _():
        # global avg-pool per image + mean over images == mean over all N*OH*OW rows
        feats = acc_ref[...] * (1.0 / n_rows)                                    # (1, F)
        logits = jnp.dot(feats, w_fc_ref[...], preferred_element_type=jnp.float32)
        logits = logits + b_fc_ref[...]                                          # (1, NC_PAD)
        o_ref[...] = jax.nn.sigmoid(logits)[None]                                # (1, 1, NC_PAD)


# ------------------------------- Host wrapper -------------------------------- #

def init_params(key, in_channels=3, f_feat=F_FEAT, num_classes=NUM_CLASSES):
    k1, k2, k3, k4 = jax.random.split(key, 4)
    # stem conv weight, PyTorch layout (F, C, 3, 3); BN folded -> just weight + bias
    w_conv = jax.random.normal(k1, (f_feat, in_channels, 3, 3), jnp.float32) * 0.05
    b_conv = jax.random.normal(k2, (f_feat,), jnp.float32) * 0.01
    # fc: Linear(in_features, num_classes), PyTorch layout (num_classes, in_features)
    w_fc = jax.random.normal(k3, (num_classes, f_feat), jnp.float32) * 0.05
    b_fc = jax.random.normal(k4, (num_classes,), jnp.float32) * 0.01
    return dict(w_conv=w_conv, b_conv=b_conv, w_fc=w_fc, b_fc=b_fc)


def palm_recognizer_forward(x, params):
    """x: (B, N, C, H, W) float32 (PyTorch NCHW per image)."""
    B, N, C, H, W = x.shape
    OH, OW = (H + 1) // 2, (W + 1) // 2                 # Conv2d(k=3, s=2, p=1) output size
    K = 9 * C
    L = N * OH * OW                                     # rows pooled per batch element

    # NCHW -> NHWC, pad, im2col (3x3 / stride 2 / pad 1); bf16 for the DMA + MXU path
    xi = jnp.transpose(x.reshape(B * N, C, H, W), (0, 2, 3, 1)).astype(jnp.bfloat16)
    xp = jnp.pad(xi, ((0, 0), (1, 1), (1, 1), (0, 0)))
    taps = [xp[:, dy:dy + 2 * OH:2, dx:dx + 2 * OW:2, :]
            for dy in range(3) for dx in range(3)]
    patches = jnp.stack(taps, axis=3).reshape(B, L, K)  # (B, L, 9*C), bf16

    # fixed row tile; pad L so every block is full, padded rows masked in-kernel
    TL = min(1024, _round_up(L, 128))
    L_pad = _round_up(L, TL)
    if L_pad != L:
        patches = jnp.pad(patches, ((0, 0), (0, L_pad - L), (0, 0)))
    n_l = L_pad // TL

    # stem weight (F, C, 3, 3) -> (3, 3, C, F) -> (K, F), bf16; bias stays f32
    w_stem = jnp.transpose(params["w_conv"], (2, 3, 1, 0)).reshape(K, F_FEAT)
    w_stem = w_stem.astype(jnp.bfloat16)
    b_stem = params["b_conv"].reshape(1, F_FEAT)

    # fc (num_classes, F) -> (F, NC_PAD), lane-dense with zero-padded extra classes
    w_fc = jnp.zeros((F_FEAT, NC_PAD), jnp.float32).at[:, :NUM_CLASSES].set(
        jnp.transpose(params["w_fc"]))
    b_fc = jnp.zeros((1, NC_PAD), jnp.float32).at[:, :NUM_CLASSES].set(
        params["b_fc"].reshape(1, NUM_CLASSES))

    kernel = functools.partial(fused_forward_kernel, n_rows=L, tile_rows=TL)

    out = pl.pallas_call(
        kernel,
        out_shape=jax.ShapeDtypeStruct((B, 1, NC_PAD), jnp.float32),
        grid=(B, n_l),
        in_specs=[
            pl.BlockSpec((1, TL, K), lambda b, l: (b, l, 0)),        # patch tile
            pl.BlockSpec((K, F_FEAT), lambda b, l: (0, 0)),          # stem weight (resident)
            pl.BlockSpec((1, F_FEAT), lambda b, l: (0, 0)),          # stem bias
            pl.BlockSpec((F_FEAT, NC_PAD), lambda b, l: (0, 0)),     # fc weight (resident)
            pl.BlockSpec((1, NC_PAD), lambda b, l: (0, 0)),          # fc bias
        ],
        out_specs=pl.BlockSpec((1, 1, NC_PAD), lambda b, l: (b, 0, 0)),
        scratch_shapes=[pltpu.VMEM((1, F_FEAT), jnp.float32)],       # pooling accumulator
        compiler_params=pltpu.CompilerParams(
            dimension_semantics=("parallel", "arbitrary")),
    )(patches, w_stem, b_stem, w_fc, b_fc)

    return out[:, 0, :NUM_CLASSES]


# ------------------------------ Pure-JAX reference --------------------------- #

def palm_recognizer_reference(x, params):
    B, N, C, H, W = x.shape
    xi = jnp.transpose(x.reshape(B * N, C, H, W), (0, 2, 3, 1))
    y = jax.lax.conv_general_dilated(
        xi, jnp.transpose(params["w_conv"], (2, 3, 1, 0)),
        window_strides=(2, 2), padding=((1, 1), (1, 1)),
        dimension_numbers=("NHWC", "HWIO", "NHWC"))
    y = y + params["b_conv"]
    y = y * jax.nn.sigmoid(y)                           # SiLU
    feats = jnp.mean(y, axis=(1, 2))                    # global avg pool -> (B*N, F)
    feats = feats.reshape(B, N, -1).mean(axis=1)        # mean over images -> (B, F)
    logits = feats @ params["w_fc"].T + params["b_fc"]
    return jax.nn.sigmoid(logits)


# ----------------------------------- Main ------------------------------------ #

if __name__ == "__main__":
    key = jax.random.PRNGKey(0)
    kx, kp = jax.random.split(key)

    B, N, C, H, W = 2, 3, 3, 16, 16                     # small shapes
    x = jax.random.normal(kx, (B, N, C, H, W), jnp.float32)
    params = init_params(kp, in_channels=C)

    fwd = jax.jit(palm_recognizer_forward)
    y = fwd(x, params)
    jax.block_until_ready(y)

    assert y.shape == (B, NUM_CLASSES), y.shape
    assert y.dtype == jnp.float32
    assert bool(jnp.all((y >= 0.0) & (y <= 1.0)))       # sigmoid output range

    y_ref = palm_recognizer_reference(x, params)
    assert bool(jnp.allclose(y, y_ref, atol=3e-2)), (y, y_ref)   # bf16-tolerant check

    print("KERNEL_OK")
</pallas_src>

<mosaic_0001>
module attributes {stable_mosaic.version = 11 : i64} {
  func.func @fused_forward_kernel(%arg0: i32, %arg1: i32, %arg2: memref<1x256x27xbf16, #tpu.memory_space<vmem>>, %arg3: memref<27x128xbf16, #tpu.memory_space<vmem>>, %arg4: memref<1x128xf32, #tpu.memory_space<vmem>>, %arg5: memref<128x128xf32, #tpu.memory_space<vmem>>, %arg6: memref<1x128xf32, #tpu.memory_space<vmem>>, %arg7: memref<1x1x128xf32, #tpu.memory_space<vmem>>, %arg8: memref<1x128xf32, #tpu.memory_space<vmem>>) attributes {dimension_semantics = [#tpu.dimension_semantics<parallel>, #tpu.dimension_semantics<arbitrary>], iteration_bounds = array<i64: 2, 1>, scalar_prefetch = 0 : i64, scratch_operands = 1 : i64, tpu.core_type = #tpu.core_type<tc>, window_params = [{transform_indices = @transform_0, window_bounds = array<i64: 1, 256, 27>}, {pipeline_mode = #tpu.pipeline_mode<synchronous>, transform_indices = @transform_1, window_bounds = array<i64: 27, 128>}, {pipeline_mode = #tpu.pipeline_mode<synchronous>, transform_indices = @transform_2, window_bounds = array<i64: 1, 128>}, {pipeline_mode = #tpu.pipeline_mode<synchronous>, transform_indices = @transform_3, window_bounds = array<i64: 128, 128>}, {pipeline_mode = #tpu.pipeline_mode<synchronous>, transform_indices = @transform_4, window_bounds = array<i64: 1, 128>}, {transform_indices = @transform_5, window_bounds = array<i64: 1, 1, 128>}]} {
    %c0_i32 = arith.constant 0 : i32
    %0 = arith.cmpi eq, %arg1, %c0_i32 : i32
    %1 = arith.extui %0 : i1 to i32
    %c0_i32_0 = arith.constant 0 : i32
    %2 = arith.cmpi ne, %1, %c0_i32_0 : i32
    scf.if %2 {
      %cst_16 = arith.constant 0.000000e+00 : f32
      %32 = vector.broadcast %cst_16 : f32 to vector<1x128xf32>
      %c0_17 = arith.constant 0 : index
      %c0_18 = arith.constant 0 : index
      %33 = vector.load %arg8[%c0_17, %c0_18] : memref<1x128xf32, #tpu.memory_space<vmem>>, vector<1x128xf32>
      tpu.vector_store %arg8[%c0_17, %c0_18], %32 {strides = array<i32>} : memref<1x128xf32, #tpu.memory_space<vmem>>, vector<1x128xf32>,
    } else {
    }
    %c0 = arith.constant 0 : index
    %c0_1 = arith.constant 0 : index
    %c0_2 = arith.constant 0 : index
    %3 = vector.load %arg2[%c0, %c0_1, %c0_2] : memref<1x256x27xbf16, #tpu.memory_space<vmem>>, vector<1x256x27xbf16>
    %4 = vector.shape_cast %3 : vector<1x256x27xbf16> to vector<256x27xbf16>
    %c0_3 = arith.constant 0 : index
    %c0_4 = arith.constant 0 : index
    %5 = vector.load %arg3[%c0_3, %c0_4] : memref<27x128xbf16, #tpu.memory_space<vmem>>, vector<27x128xbf16>
    %cst = arith.constant dense<0.000000e+00> : vector<256x128xf32>
    %6 = tpu.matmul %4, %5, %cst {dimension_numbers = #tpu.dot_dimension_numbers<[1], [0], [0], [1], [0, 0, 1, 1], [], []>} : vector<256x27xbf16>, vector<27x128xbf16>, vector<256x128xf32> -> vector<256x128xf32>
    %c0_5 = arith.constant 0 : index
    %c0_6 = arith.constant 0 : index
    %7 = vector.load %arg4[%c0_5, %c0_6] : memref<1x128xf32, #tpu.memory_space<vmem>>, vector<1x128xf32>
    %8 = vector.broadcast %7 : vector<1x128xf32> to vector<256x128xf32>
    %9 = arith.addf %6, %8 : vector<256x128xf32>
    %10 = arith.negf %9 : vector<256x128xf32>
    %11 = math.exp %10 : vector<256x128xf32>
    %cst_7 = arith.constant 1.000000e+00 : f32
    %12 = vector.broadcast %cst_7 : f32 to vector<256x128xf32>
    %13 = arith.addf %12, %11 : vector<256x128xf32>
    %14 = arith.divf %12, %13 : vector<256x128xf32>
    %15 = arith.mulf %9, %14 : vector<256x128xf32>
    %c256_i32 = arith.constant 256 : i32
    %16 = arith.muli %arg1, %c256_i32 : i32
    %17 = tpu.iota {dimensions = array<i32: 0>} : vector<256x128xi32>
    %18 = vector.broadcast %16 : i32 to vector<256x128xi32>
    %19 = arith.addi %18, %17 : vector<256x128xi32>
    %c192_i32 = arith.constant 192 : i32
    %20 = vector.broadcast %c192_i32 : i32 to vector<256x128xi32>
    %21 = arith.cmpi slt, %19, %20 : vector<256x128xi32>
    %cst_8 = arith.constant 0.000000e+00 : f32
    %22 = vector.broadcast %cst_8 : f32 to vector<256x128xf32>
    %23 = arith.select %21, %15, %22 : vector<256x128xi1>, vector<256x128xf32>
    %c0_9 = arith.constant 0 : index
    %c0_10 = arith.constant 0 : index
    %24 = vector.load %arg8[%c0_9, %c0_10] : memref<1x128xf32, #tpu.memory_space<vmem>>, vector<1x128xf32>
    %cst_11 = arith.constant dense<0.000000e+00> : vector<128xf32>
    %25 = vector.multi_reduction <add>, %23, %cst_11 [0] : vector<256x128xf32> to vector<128xf32>
    %26 = vector.shape_cast %25 : vector<128xf32> to vector<1x128xf32>
    %27 = arith.addf %24, %26 : vector<1x128xf32>
    %c0_12 = arith.constant 0 : index
    %c0_13 = arith.constant 0 : index
    %28 = vector.load %arg8[%c0_12, %c0_13] : memref<1x128xf32, #tpu.memory_space<vmem>>, vector<1x128xf32>
    tpu.vector_store %arg8[%c0_12, %c0_13], %27 {strides = array<i32>} : memref<1x128xf32, #tpu.memory_space<vmem>>, vector<1x128xf32>,
    %c0_i32_14 = arith.constant 0 : i32
    %29 = arith.cmpi eq, %arg1, %c0_i32_14 : i32
    %30 = arith.extui %29 : i1 to i32
    %c0_i32_15 = arith.constant 0 : i32
    %31 = arith.cmpi ne, %30, %c0_i32_15 : i32
    scf.if %31 {
      %c0_16 = arith.constant 0 : index
      %c0_17 = arith.constant 0 : index
      %32 = vector.load %arg8[%c0_16, %c0_17] : memref<1x128xf32, #tpu.memory_space<vmem>>, vector<1x128xf32>
      %cst_18 = arith.constant 0.00520833349 : f32
      %33 = vector.broadcast %cst_18 : f32 to vector<1x128xf32>
      %34 = arith.mulf %32, %33 : vector<1x128xf32>
      %c0_19 = arith.constant 0 : index
      %c0_20 = arith.constant 0 : index
      %35 = vector.load %arg5[%c0_19, %c0_20] : memref<128x128xf32, #tpu.memory_space<vmem>>, vector<128x128xf32>
      %cst_21 = arith.constant dense<0.000000e+00> : vector<1x128xf32>
      %36 = tpu.matmul %34, %35, %cst_21 {dimension_numbers = #tpu.dot_dimension_numbers<[1], [0], [0], [1], [0, 0, 1, 1], [], []>} : vector<1x128xf32>, vector<128x128xf32>, vector<1x128xf32> -> vector<1x128xf32>
      %c0_22 = arith.constant 0 : index
      %c0_23 = arith.constant 0 : index
      %37 = vector.load %arg6[%c0_22, %c0_23] : memref<1x128xf32, #tpu.memory_space<vmem>>, vector<1x128xf32>
      %38 = arith.addf %36, %37 : vector<1x128xf32>
      %39 = arith.negf %38 : vector<1x128xf32>
      %40 = math.exp %39 : vector<1x128xf32>
      %cst_24 = arith.constant 1.000000e+00 : f32
      %41 = vector.broadcast %cst_24 : f32 to vector<1x128xf32>
      %42 = arith.addf %41, %40 : vector<1x128xf32>
      %43 = arith.divf %41, %42 : vector<1x128xf32>
      %44 = vector.shape_cast %43 : vector<1x128xf32> to vector<1x1x128xf32>
      %c0_25 = arith.constant 0 : index
      %c0_26 = arith.constant 0 : index
      %c0_27 = arith.constant 0 : index
      %45 = vector.load %arg7[%c0_25, %c0_26, %c0_27] : memref<1x1x128xf32, #tpu.memory_space<vmem>>, vector<1x1x128xf32>
      tpu.vector_store %arg7[%c0_25, %c0_26, %c0_27], %44 {strides = array<i32>} : memref<1x1x128xf32, #tpu.memory_space<vmem>>, vector<1x1x128xf32>,
    } else {
    }
    return
  }
  func.func @transform_0(%arg0: i32, %arg1: i32) -> (i32, i32, i32) {
    %c0_i32 = arith.constant 0 : i32
    %c0_i32_0 = arith.constant 0 : i32
    return %arg0, %arg1, %c0_i32 : i32, i32, i32
  }
  func.func @transform_1(%arg0: i32, %arg1: i32) -> (i32, i32) {
    %c0_i32 = arith.constant 0 : i32
    %c0_i32_0 = arith.constant 0 : i32
    %c0_i32_1 = arith.constant 0 : i32
    return %c0_i32, %c0_i32_0 : i32, i32
  }
  func.func @transform_2(%arg0: i32, %arg1: i32) -> (i32, i32) {
    %c0_i32 = arith.constant 0 : i32
    %c0_i32_0 = arith.constant 0 : i32
    %c0_i32_1 = arith.constant 0 : i32
    return %c0_i32, %c0_i32_0 : i32, i32
  }
  func.func @transform_3(%arg0: i32, %arg1: i32) -> (i32, i32) {
    %c0_i32 = arith.constant 0 : i32
    %c0_i32_0 = arith.constant 0 : i32
    %c0_i32_1 = arith.constant 0 : i32
    return %c0_i32, %c0_i32_0 : i32, i32
  }
  func.func @transform_4(%arg0: i32, %arg1: i32) -> (i32, i32) {
    %c0_i32 = arith.constant 0 : i32
    %c0_i32_0 = arith.constant 0 : i32
    %c0_i32_1 = arith.constant 0 : i32
    return %c0_i32, %c0_i32_0 : i32, i32
  }
  func.func @transform_5(%arg0: i32, %arg1: i32) -> (i32, i32, i32) {
    %c0_i32 = arith.constant 0 : i32
    %c0_i32_0 = arith.constant 0 : i32
    %c0_i32_1 = arith.constant 0 : i32
    return %arg0, %c0_i32, %c0_i32_0 : i32, i32, i32
  }
}

</mosaic_0001>

<llo_original>
// kernel: palm_recognizer_forward.1
$region0: #{palm_recognizer_forward.1}
  #allocation0 [shape = 'u32[]', space=smem, size = 0x4, offset = 0x4, fixed_abs, tag = 'smem constant byte address 0x4 - core index']
  #allocation1 [shape = 'u32[144,128]{1,0:T(1,128)}', space=vmem, size = 0x12000, scoped, tag = 'internal scratch']
  #allocation2 [shape = 'f32[1,128]{1,0:T(1,128)}', space=vmem, size = 0x200, scoped, tag = 'scratch operand']
  %s0 = inlined_call_operand.vmem [shape: bf16[2,256,27], index: 0, kind: input, shape index: {}]
  %s1 = inlined_call_operand.vmem [shape: bf16[27,128], index: 1, kind: input, shape index: {}]
  %s2 = inlined_call_operand.vmem [shape: f32[1,128], index: 2, kind: input, shape index: {}]
  %s3 = inlined_call_operand.vmem [shape: f32[128,128], index: 3, kind: input, shape index: {}]
  %s4 = inlined_call_operand.vmem [shape: f32[1,128], index: 4, kind: input, shape index: {}]
  %s5 = inlined_call_operand.hbm [shape: f32[2,1,128], index: 5, kind: output, shape index: {}]
  %s6 = sld [smem:[#allocation0]]
  $region61: #{palm_recognizer_forward.1} parent=0
    _
  %s8 = ssub.s32 1, %s6
  %s9 = scalar_select 0, %s8, %s6
  $region1: #{palm_recognizer_forward.1} parent=0
    #allocation3 [shape = 'u8[1024]{0}', space=vmem, size = 0x400, scoped, tag = 'output window, operand 0']
    #allocation4 [shape = 's32[2]{0}', space=sflag, size = 0x8, scoped, tag = 'scoped memory for palm_recognizer_forward.1']
    %10 = vsyncpa [#allocation4], 0
    %s11 = scalar_lea.sflag [#allocation4], 1
    %12 = vsyncpa %s11, 0
    loop: start=0, step=1, limit=4
    $region2: #{palm_recognizer_forward.1} parent=1 // loop_pre_header
      _
    $region3: #{palm_recognizer_forward.1} parent=1 // loop_header
      %s14 = sphi 0, %s18
      %p15 = scmp.ge.s32.totalorder %s14, 4
      %s21 = sphi 0, %s33
      %s22 = sphi 0, %s29
      %s23 = sphi 0, %s21
      %s24 = sphi 0, %s22
      %s25 = sphi 0, %s23
      %s26 = sphi 0, %s24
      %s38 = sphi 0, %s40
      %s41 = sphi 0, %s38
      %s42 = sphi 0, %s41
      %s58 = sphi 0, %s42
      %s62 = sphi 0, %s62
      %s64 = sphi 0, %s62
      %s65 = sphi 0, %s64
      %s79 = sphi 0, %s65
      %s83 = sphi 0, %s83
      %s85 = sphi 0, %s83
      %s86 = sphi 0, %s85
      %s100 = sphi 0, %s86
      %s104 = sphi 0, %s104
      %s106 = sphi 0, %s104
      %s107 = sphi 0, %s106
      %s121 = sphi 0, %s107
      %s125 = sphi 0, %s125
      %s127 = sphi 0, %s125
      %s128 = sphi 0, %s127
      %s142 = sphi 0, %s128
      %s148 = sphi 0, %s150
      %s151 = sphi 0, %s148
      %s152 = sphi 0, %s151
      %s168 = sphi 0, %s152
    $region4: #{palm_recognizer_forward.1} parent=1 // loop_header_branch
      %17 = sbr.rel (%p15) target = $region8
    $region5: #{palm_recognizer_forward.1} parent=1 // loop_body
      %s19 = ssub.s32 %s14, 1
      %s20 = ssub.s32 %s14, 2
      %s27 = sadd.s32 1, %s22
      %p28 = scmp.ge.s32.totalorder %s27, 1
      %s29 = scalar_select %p28, 0, %s27
      %s30 = sadd.s32 1, %s21
      %s31 = scalar_select %p28, %s30, %s21
      %p32 = scmp.ge.s32.totalorder %s31, 2
      %s33 = scalar_select %p32, 0, %s31
      %s34 = ssub.s32 %s21, %s33
      %s35 = ssub.s32 %s22, %s29
      %s36 = sor.u32 %s34, %s35
      %p37 = scmp.eq.s32.totalorder %s36, 0
      %s39 = sadd.s32 %s38, 1
      %s40 = scalar_select %p37, %s38, %s39
      %p43 = pneg %p37
      %p44 = scmp.eq.s32.totalorder %s14, 1
      %p45 = por %p43, %p44
      %p46 = scmp.ne.s32.totalorder %s38, %s41
      %p47 = scmp.eq.s32.totalorder %s14, 0
      %p48 = por %p46, %p47
      %p49 = scmp.ne.s32.totalorder %s38, %s41
      %p50 = scmp.eq.s32.totalorder %s19, 1
      %p51 = por %p49, %p50
      %p52 = scmp.ne.s32.totalorder %s41, %s42
      %p53 = scmp.eq.s32.totalorder %s19, 0
      %p54 = por %p52, %p53
      %p55 = scmp.ne.s32.totalorder %s41, %s42
      %p56 = scmp.eq.s32.totalorder %s20, 1
      %p57 = por %p55, %p56
      %p59 = scmp.ne.s32.totalorder %s42, %s58
      %p60 = scmp.eq.s32.totalorder %s20, 0
      %p61 = por %p59, %p60
      %s63 = sadd.s32 %s62, 1
      %p66 = scmp.eq.s32.totalorder %s14, 1
      %p67 = scmp.ne.s32.totalorder %s62, %s64
      %p68 = scmp.eq.s32.totalorder %s14, 0
      %p69 = por %p67, %p68
      %p70 = scmp.ne.s32.totalorder %s62, %s64
      %p71 = scmp.eq.s32.totalorder %s19, 1
      %p72 = por %p70, %p71
      %p73 = scmp.ne.s32.totalorder %s64, %s65
      %p74 = scmp.eq.s32.totalorder %s19, 0
      %p75 = por %p73, %p74
      %p76 = scmp.ne.s32.totalorder %s64, %s65
      %p77 = scmp.eq.s32.totalorder %s20, 1
      %p78 = por %p76, %p77
      %p80 = scmp.ne.s32.totalorder %s65, %s79
      %p81 = scmp.eq.s32.totalorder %s20, 0
      %p82 = por %p80, %p81
      %s84 = sadd.s32 %s83, 1
      %p87 = scmp.eq.s32.totalorder %s14, 1
      %p88 = scmp.ne.s32.totalorder %s83, %s85
      %p89 = scmp.eq.s32.totalorder %s14, 0
      %p90 = por %p88, %p89
      %p91 = scmp.ne.s32.totalorder %s83, %s85
      %p92 = scmp.eq.s32.totalorder %s19, 1
      %p93 = por %p91, %p92
      %p94 = scmp.ne.s32.totalorder %s85, %s86
      %p95 = scmp.eq.s32.totalorder %s19, 0
      %p96 = por %p94, %p95
      %p97 = scmp.ne.s32.totalorder %s85, %s86
      %p98 = scmp.eq.s32.totalorder %s20, 1
      %p99 = por %p97, %p98
      %p101 = scmp.ne.s32.totalorder %s86, %s100
      %p102 = scmp.eq.s32.totalorder %s20, 0
      %p103 = por %p101, %p102
      %s105 = sadd.s32 %s104, 1
      %p108 = scmp.eq.s32.totalorder %s14, 1
      %p109 = scmp.ne.s32.totalorder %s104, %s106
      %p110 = scmp.eq.s32.totalorder %s14, 0
      %p111 = por %p109, %p110
      %p112 = scmp.ne.s32.totalorder %s104, %s106
      %p113 = scmp.eq.s32.totalorder %s19, 1
      %p114 = por %p112, %p113
      %p115 = scmp.ne.s32.totalorder %s106, %s107
      %p116 = scmp.eq.s32.totalorder %s19, 0
      %p117 = por %p115, %p116
      %p118 = scmp.ne.s32.totalorder %s106, %s107
      %p119 = scmp.eq.s32.totalorder %s20, 1
      %p120 = por %p118, %p119
      %p122 = scmp.ne.s32.totalorder %s107, %s121
      %p123 = scmp.eq.s32.totalorder %s20, 0
      %p124 = por %p122, %p123
      %s126 = sadd.s32 %s125, 1
      %p129 = scmp.eq.s32.totalorder %s14, 1
      %p130 = scmp.ne.s32.totalorder %s125, %s127
      %p131 = scmp.eq.s32.totalorder %s14, 0
      %p132 = por %p130, %p131
      %p133 = scmp.ne.s32.totalorder %s125, %s127
      %p134 = scmp.eq.s32.totalorder %s19, 1
      %p135 = por %p133, %p134
      %p136 = scmp.ne.s32.totalorder %s127, %s128
      %p137 = scmp.eq.s32.totalorder %s19, 0
      %p138 = por %p136, %p137
      %p139 = scmp.ne.s32.totalorder %s127, %s128
      %p140 = scmp.eq.s32.totalorder %s20, 1
      %p141 = por %p139, %p140
      %p143 = scmp.ne.s32.totalorder %s128, %s142
      %p144 = scmp.eq.s32.totalorder %s20, 0
      %p145 = por %p143, %p144
      %s146 = ssub.s32 %s21, %s33
      %p147 = scmp.eq.s32.totalorder %s146, 0
      %s149 = sadd.s32 %s148, 1
      %s150 = scalar_select %p147, %s148, %s149
      %p153 = pneg %p147
      %p154 = scmp.eq.s32.totalorder %s14, 1
      %p155 = por %p153, %p154
      %p156 = scmp.ne.s32.totalorder %s148, %s151
      %p157 = scmp.eq.s32.totalorder %s14, 0
      %p158 = por %p156, %p157
      %p159 = scmp.ne.s32.totalorder %s148, %s151
      %p160 = scmp.eq.s32.totalorder %s19, 1
      %p161 = por %p159, %p160
      %p162 = scmp.ne.s32.totalorder %s151, %s152
      %p163 = scmp.eq.s32.totalorder %s19, 0
      %p164 = por %p162, %p163
      %p165 = scmp.ne.s32.totalorder %s151, %s152
      %p166 = scmp.eq.s32.totalorder %s20, 1
      %p167 = por %p165, %p166
      %p169 = scmp.ne.s32.totalorder %s152, %s168
      %p170 = scmp.eq.s32.totalorder %s20, 0
      %p171 = por %p169, %p170
      %p172 = scmp.le.s32.totalorder 1, %s14
      %p173 = scmp.lt.s32.totalorder %s14, 3
      %p174 = pnand %p172, %p173
      %p175 = pneg %p174
      // Predicated region
      $region9: #{palm_recognizer_forward.1} parent=5 // pred_check
        _
      $region10: #{palm_recognizer_forward.1} parent=5 // pred_check_branch
        %177 = sbr.rel (%p174) target = $region12
      $region11: #{palm_recognizer_forward.1} parent=5 // pred_region
        %s178 = ssub.s32 %s14, 1
        // Predicated region
        $region13: #{palm_recognizer_forward.1} parent=11 // pred_check
          %p179 = pneg %p75
        $region14: #{palm_recognizer_forward.1} parent=11 // pred_check_branch
          %181 = sbr.rel (%p179) target = $region16
        $region15: #{palm_recognizer_forward.1} parent=11 // pred_region
          _
        $region16: #{palm_recognizer_forward.1} parent=11 // pred_fallthru
          _
        // Predicated region
        $region17: #{palm_recognizer_forward.1} parent=11 // pred_check
          %p182 = pneg %p96
        $region18: #{palm_recognizer_forward.1} parent=11 // pred_check_branch
          %184 = sbr.rel (%p182) target = $region20
        $region19: #{palm_recognizer_forward.1} parent=11 // pred_region
          _
        $region20: #{palm_recognizer_forward.1} parent=11 // pred_fallthru
          _
        // Predicated region
        $region21: #{palm_recognizer_forward.1} parent=11 // pred_check
          %p185 = pneg %p117
        $region22: #{palm_recognizer_forward.1} parent=11 // pred_check_branch
          %187 = sbr.rel (%p185) target = $region24
        $region23: #{palm_recognizer_forward.1} parent=11 // pred_region
          _
        $region24: #{palm_recognizer_forward.1} parent=11 // pred_fallthru
          _
        // Predicated region
        $region25: #{palm_recognizer_forward.1} parent=11 // pred_check
          %p188 = pneg %p138
        $region26: #{palm_recognizer_forward.1} parent=11 // pred_check_branch
          %190 = sbr.rel (%p188) target = $region28
        $region27: #{palm_recognizer_forward.1} parent=11 // pred_region
          _
        $region28: #{palm_recognizer_forward.1} parent=11 // pred_fallthru
          _
      $region12: #{palm_recognizer_forward.1} parent=5 // pred_fallthru
        _
      %p191 = scmp.lt.s32.totalorder %s14, 2
      // Predicated region
      $region29: #{palm_recognizer_forward.1} parent=5 // pred_check
        %p192 = pneg %p191
      $region30: #{palm_recognizer_forward.1} parent=5 // pred_check_branch
        %194 = sbr.rel (%p192) target = $region32
      $region31: #{palm_recognizer_forward.1} parent=5 // pred_region
        // Predicated region
        $region33: #{palm_recognizer_forward.1} parent=31 // pred_check
          %p195 = pneg %p48
        $region34: #{palm_recognizer_forward.1} parent=31 // pred_check_branch
          %197 = sbr.rel (%p195) target = $region36
        $region35: #{palm_recognizer_forward.1} parent=31 // pred_region
          %s198 = smul.u32 32, %s22
          %p199 = scmp.lt.s32.totalorder %s21, 1
          %s200 = scalar_select %p199, %s21, 1
          %p201 = scmp.lt.s32.totalorder %s198, 31
          %s202 = scalar_select %p201, %s198, 31
          %s203 = smul.addr %s200, 32
          %s204 = sadd.s32 %s202, %s203
          %s205 = smul.addr %s204, 4
          %s206 = scalar_lea.vmem %s0, %s205
          %s207 = smul.u32 32, %s22
        $region36: #{palm_recognizer_forward.1} parent=31 // pred_fallthru
          _
      $region32: #{palm_recognizer_forward.1} parent=5 // pred_fallthru
        _
      %p208 = scmp.le.s32.totalorder 1, %s14
      %p209 = scmp.lt.s32.totalorder %s14, 3
      %p210 = pnand %p208, %p209
      %p211 = pneg %p210
      // Predicated region
      $region37: #{palm_recognizer_forward.1} parent=5 // pred_check
        _
      $region38: #{palm_recognizer_forward.1} parent=5 // pred_check_branch
        %213 = sbr.rel (%p210) target = $region40
      $region39: #{palm_recognizer_forward.1} parent=5 // pred_region
        %s214 = ssub.s32 %s14, 1
        %s215 = smul.u32 32, %s24
        %p216 = scmp.lt.s32.totalorder %s23, 1
        %s217 = scalar_select %p216, %s23, 1
        %p218 = scmp.lt.s32.totalorder %s215, 31
        %s219 = scalar_select %p218, %s215, 31
        %s220 = smul.addr %s217, 32
        %s221 = sadd.s32 %s219, %s220
        %s222 = smul.addr %s221, 4
        %s223 = scalar_lea.vmem %s0, %s222
        %p224 = pneg %p54
        %p225 = pneg %p51
        %p226 = pneg %p75
        %p227 = pneg %p72
        %p228 = pneg %p96
        %p229 = pneg %p93
        %p230 = pneg %p117
        %p231 = pneg %p114
        %p232 = pneg %p138
        %p233 = pneg %p135
        %p234 = pneg %p164
        %p235 = pneg %p161
        %s236 = sand.u32 %s151, 1
        %s237 = scalar_lea.sflag [#allocation4], %s236
        %s238 = sand.u32 %s151, 1
        %s239 = scalar_lea.vmem [#allocation3], %s238
        %s240 = smul.u32 32, %s24
        %p241 = scmp.lt.s32.totalorder %s23, 1
        %s242 = scalar_select %p241, %s23, 1
        %p243 = scmp.lt.s32.totalorder %s240, 31
        %s244 = scalar_select %p243, %s240, 31
        %s245 = smul.addr %s242, 32
        %s246 = sadd.s32 %s244, %s245
        %s247 = smul.addr %s246, 4
        %s248 = scalar_lea.vmem %s0, %s247
        %s249 = smul.u32 32, %s24
        %p251 = scmp.eq.s32.totalorder %s24, 0
        // Predicated region
        $region41: #{palm_recognizer_forward.1} parent=39 // pred_check
          %p252 = pneg %p251
        $region42: #{palm_recognizer_forward.1} parent=39 // pred_check_branch
          %254 = sbr.rel (%p252) target = $region44
        $region43: #{palm_recognizer_forward.1} parent=39 // pred_region
          %255 = vst [vmem:[#allocation2] sm:$0x1] 0.0
        $region44: #{palm_recognizer_forward.1} parent=39 // pred_fallthru
          _
        %v256 = vld [vmem:[%s248] sm:$0xf]
        %v257 = vld [vmem:[%s248 + $0x4] sm:$0xf]
        %v258 = vld [vmem:[%s248 + $0x8] sm:$0xf]
        %v259 = vld [vmem:[%s248 + $0xc] sm:$0xf]
        %v260 = vld [vmem:[%s248 + $0x10] sm:$0xf]
        %v261 = vld [vmem:[%s248 + $0x14] sm:$0xf]
        %v262 = vld [vmem:[%s248 + $0x18] sm:$0xf]
        %v263 = vld [vmem:[%s248 + $0x1c] sm:$0xf]
        %v264 = vld [vmem:[%s248 + $0x20] sm:$0xf]
        %v265 = vld [vmem:[%s248 + $0x24] sm:$0xf]
        %v266 = vld [vmem:[%s248 + $0x28] sm:$0xf]
        %v267 = vld [vmem:[%s248 + $0x2c] sm:$0xf]
        %v268 = vld [vmem:[%s248 + $0x30] sm:$0xf]
        %v269 = vld [vmem:[%s248 + $0x34] sm:$0xf]
        %v270 = vld [vmem:[%s248 + $0x38] sm:$0xf]
        %v271 = vld [vmem:[%s248 + $0x3c] sm:$0xf]
        %v272 = vld [vmem:[%s248 + $0x40] sm:$0xf]
        %v273 = vld [vmem:[%s248 + $0x44] sm:$0xf]
        %v274 = vld [vmem:[%s248 + $0x48] sm:$0xf]
        %v275 = vld [vmem:[%s248 + $0x4c] sm:$0xf]
        %v276 = vld [vmem:[%s248 + $0x50] sm:$0xf]
        %v277 = vld [vmem:[%s248 + $0x54] sm:$0xf]
        %v278 = vld [vmem:[%s248 + $0x58] sm:$0xf]
        %v279 = vld [vmem:[%s248 + $0x5c] sm:$0xf]
        %v280 = vld [vmem:[%s248 + $0x60] sm:$0xf]
        %v281 = vld [vmem:[%s248 + $0x64] sm:$0xf]
        %v282 = vld [vmem:[%s248 + $0x68] sm:$0xf]
        %v283 = vld [vmem:[%s248 + $0x6c] sm:$0xf]
        %v284 = vld [vmem:[%s248 + $0x70] sm:$0xf]
        %v285 = vld [vmem:[%s248 + $0x74] sm:$0xf]
        %v286 = vld [vmem:[%s248 + $0x78] sm:$0xf]
        %v287 = vld [vmem:[%s248 + $0x7c] sm:$0xf]
        %v288 = vld [vmem:[%s1] sm:$0xf]
        %v289 = vld [vmem:[%s1 + $0x4] sm:$0xf]
        %v290 = vld [vmem:[%s1 + $0x8] sm:$0xf]
        %v291 = vld [vmem:[%s1 + $0xc] sm:$0x3]
        %v292 = vld [vmem:[%s2] sm:$0x1]
        %v294 = vlaneseq
        %v295 = vshrl.u32 %v294, 7
        %v296 = vsub.s32 0, %v295
        %v297 = vrot.slane %v292, %v296
        %v331 = vunpack.c.l.b16 %v256
        %v332 = vunpack.c.l.b16 %v257
        %v333 = vunpack.c.l.b16 %v258
        %v334 = vunpack.c.l.b16 %v259
        %v335 = vunpack.c.l.b16 %v260
        %v336 = vunpack.c.l.b16 %v261
        %v337 = vunpack.c.l.b16 %v262
        %v338 = vunpack.c.l.b16 %v263
        %v339 = vunpack.c.l.b16 %v264
        %v340 = vunpack.c.l.b16 %v265
        %v341 = vunpack.c.l.b16 %v266
        %v342 = vunpack.c.l.b16 %v267
        %v343 = vunpack.c.l.b16 %v268
        %v344 = vunpack.c.l.b16 %v269
        %v345 = vunpack.c.l.b16 %v270
        %v346 = vunpack.c.l.b16 %v271
        %v347 = vunpack.c.l.b16 %v272
        %v348 = vunpack.c.l.b16 %v273
        %v349 = vunpack.c.l.b16 %v274
        %v350 = vunpack.c.l.b16 %v275
        %v351 = vunpack.c.l.b16 %v276
        %v352 = vunpack.c.l.b16 %v277
        %v353 = vunpack.c.l.b16 %v278
        %v354 = vunpack.c.l.b16 %v279
        %v355 = vunpack.c.l.b16 %v280
        %v356 = vunpack.c.l.b16 %v281
        %v357 = vunpack.c.l.b16 %v282
        %v358 = vunpack.c.l.b16 %v283
        %v359 = vunpack.c.l.b16 %v284
        %v360 = vunpack.c.l.b16 %v285
        %v361 = vunpack.c.l.b16 %v286
        %v362 = vunpack.c.l.b16 %v287
        %v363 = vpack.c.b16 %v332, %v331
        %v364 = vpack.c.b16 %v334, %v333
        %v365 = vpack.c.b16 %v336, %v335
        %v366 = vpack.c.b16 %v338, %v337
        %v367 = vpack.c.b16 %v340, %v339
        %v368 = vpack.c.b16 %v342, %v341
        %v369 = vpack.c.b16 %v344, %v343
        %v370 = vpack.c.b16 %v346, %v345
        %v371 = vpack.c.b16 %v348, %v347
        %v372 = vpack.c.b16 %v350, %v349
        %v373 = vpack.c.b16 %v352, %v351
        %v374 = vpack.c.b16 %v354, %v353
        %v375 = vpack.c.b16 %v356, %v355
        %v376 = vpack.c.b16 %v358, %v357
        %v377 = vpack.c.b16 %v360, %v359
        %v378 = vpack.c.b16 %v362, %v361
        %v383 = vunpack.c.l.b16 %v288
        %v384 = vunpack.c.l.b16 %v289
        %v385 = vunpack.c.l.b16 %v290
        %v386 = vunpack.c.l.b16 %v291
        %v387 = vpack.c.b16 %v384, %v383
        %v388 = vpack.c.b16 %v386, %v385
        %vm390 = vcmask 220160
        %v392 = vsel %vm390, %v363, 0
        %v395 = vsel %vm390, %v364, 0
        %v398 = vsel %vm390, %v365, 0
        %v401 = vsel %vm390, %v366, 0
        %v404 = vsel %vm390, %v367, 0
        %v407 = vsel %vm390, %v368, 0
        %v410 = vsel %vm390, %v369, 0
        %v413 = vsel %vm390, %v370, 0
        %v416 = vsel %vm390, %v371, 0
        %v419 = vsel %vm390, %v372, 0
        %v422 = vsel %vm390, %v373, 0
        %v425 = vsel %vm390, %v374, 0
        %v428 = vsel %vm390, %v375, 0
        %v431 = vsel %vm390, %v376, 0
        %v434 = vsel %vm390, %v377, 0
        %v437 = vsel %vm390, %v378, 0
        %vm439 = vcmask 1044480
        %vm440 = vcmask 1045504
        %v441 = vsel %vm439, 4294967295, 65535
        %v442 = vsel %vm440, %v441, 0
        %v444 = vand.u32 %v388, %v442
        %446 = vmatprep.subr.bf16.mxu0 0
        %447 = vmatpush1.bf16.msra.mxu0 0
        %448 = vmatprep.subr.bf16.mxu0 0
        %449 = vmatpush1.bf16.msra.mxu0 0
        %450 = vmatprep.subr.bf16.mxu0 0
        %451 = vmatpush1.bf16.msra.mxu0 0
        %452 = vmatprep.subr.bf16.mxu0 0
        %453 = vmatpush1.bf16.msra.mxu0 0
        %454 = vmatprep.subr.bf16.mxu0 0
        %455 = vmatpush1.bf16.msra.mxu0 0
        %456 = vmatprep.subr.bf16.mxu0 0
        %457 = vmatpush1.bf16.msra.mxu0 0
        %458 = vmatprep.subr.bf16.mxu0 0
        %459 = vmatpush1.bf16.msra.mxu0 %v444
        %460 = vmatprep.subr.bf16.mxu0 0
        %461 = vmatpush1.bf16.msra.mxu0 %v387
        %462 = vmatprep.subr.bf16.mxu0 0
        %463 = vmatpush2.bf16.msra.mxu0 0
        %464 = vmatprep.subr.bf16.mxu0 0
        %465 = vmatpush2.bf16.msra.mxu0 0
        %466 = vmatprep.subr.bf16.mxu0 0
        %467 = vmatpush2.bf16.msra.mxu0 0
        %468 = vmatprep.subr.bf16.mxu0 0
        %469 = vmatpush2.bf16.msra.mxu0 0
        %470 = vmatprep.subr.bf16.mxu0 0
        %471 = vmatpush2.bf16.msra.mxu0 0
        %472 = vmatprep.subr.bf16.mxu0 0
        %473 = vmatpush2.bf16.msra.mxu0 0
        %474 = vmatprep.subr.bf16.mxu0 0
        %475 = vmatpush2.bf16.msra.mxu0 0
        %476 = vmatprep.subr.bf16.mxu0 0
        %477 = vmatpush2.bf16.msra.mxu0 0
        %478 = vmatprep.mubr.bf16.mxu0 0
        %479 = vmatmul.mubr.bf16.gmra.mxu0 %v392
        %v480 = vpop.f32.mrf.mxu0
        %v481 = vadd.f32 %v297, %v480
        %v482 = vpop.f32.mrf.mxu0
        %v483 = vpop.f32.mrf.mxu0
        %v484 = vadd.f32 %v297, %v483
        %v485 = vpop.f32.mrf.mxu0
        %486 = vmatprep.mubr.bf16.mxu0 0
        %487 = vmatmul.mubr.bf16.gmra.mxu0 %v395
        %v488 = vpop.f32.mrf.mxu0
        %v489 = vadd.f32 %v297, %v488
        %v490 = vpop.f32.mrf.mxu0
        %v491 = vpop.f32.mrf.mxu0
        %v492 = vadd.f32 %v297, %v491
        %v493 = vpop.f32.mrf.mxu0
        %494 = vmatprep.mubr.bf16.mxu0 0
        %495 = vmatmul.mubr.bf16.gmra.mxu0 %v398
        %v496 = vpop.f32.mrf.mxu0
        %v497 = vadd.f32 %v297, %v496
        %v498 = vpop.f32.mrf.mxu0
        %v499 = vpop.f32.mrf.mxu0
        %v500 = vadd.f32 %v297, %v499
        %v501 = vpop.f32.mrf.mxu0
        %502 = vmatprep.mubr.bf16.mxu0 0
        %503 = vmatmul.mubr.bf16.gmra.mxu0 %v401
        %v504 = vpop.f32.mrf.mxu0
        %v505 = vadd.f32 %v297, %v504
        %v506 = vpop.f32.mrf.mxu0
        %v507 = vpop.f32.mrf.mxu0
        %v508 = vadd.f32 %v297, %v507
        %v509 = vpop.f32.mrf.mxu0
        %510 = vmatprep.mubr.bf16.mxu0 0
        %511 = vmatmul.mubr.bf16.gmra.mxu0 %v404
        %v512 = vpop.f32.mrf.mxu0
        %v513 = vadd.f32 %v297, %v512
        %v514 = vpop.f32.mrf.mxu0
        %v515 = vpop.f32.mrf.mxu0
        %v516 = vadd.f32 %v297, %v515
        %v517 = vpop.f32.mrf.mxu0
        %518 = vmatprep.mubr.bf16.mxu0 0
        %519 = vmatmul.mubr.bf16.gmra.mxu0 %v407
        %v520 = vpop.f32.mrf.mxu0
        %v521 = vadd.f32 %v297, %v520
        %v522 = vpop.f32.mrf.mxu0
        %v523 = vpop.f32.mrf.mxu0
        %v524 = vadd.f32 %v297, %v523
        %v525 = vpop.f32.mrf.mxu0
        %526 = vmatprep.mubr.bf16.mxu0 0
        %527 = vmatmul.mubr.bf16.gmra.mxu0 %v410
        %v528 = vpop.f32.mrf.mxu0
        %v529 = vadd.f32 %v297, %v528
        %v530 = vpop.f32.mrf.mxu0
        %v531 = vpop.f32.mrf.mxu0
        %v532 = vadd.f32 %v297, %v531
        %v533 = vpop.f32.mrf.mxu0
        %534 = vmatprep.mubr.bf16.mxu0 0
        %535 = vmatmul.mubr.bf16.gmra.mxu0 %v413
        %v536 = vpop.f32.mrf.mxu0
        %v537 = vadd.f32 %v297, %v536
        %v538 = vpop.f32.mrf.mxu0
        %v539 = vpop.f32.mrf.mxu0
        %v540 = vadd.f32 %v297, %v539
        %v541 = vpop.f32.mrf.mxu0
        %542 = vmatprep.mubr.bf16.mxu0 0
        %543 = vmatmul.mubr.bf16.gmra.mxu0 %v416
        %v544 = vpop.f32.mrf.mxu0
        %v545 = vadd.f32 %v297, %v544
        %v546 = vpop.f32.mrf.mxu0
        %v547 = vpop.f32.mrf.mxu0
        %v548 = vadd.f32 %v297, %v547
        %v549 = vpop.f32.mrf.mxu0
        %550 = vmatprep.mubr.bf16.mxu0 0
        %551 = vmatmul.mubr.bf16.gmra.mxu0 %v419
        %v552 = vpop.f32.mrf.mxu0
        %v553 = vadd.f32 %v297, %v552
        %v554 = vpop.f32.mrf.mxu0
        %v555 = vpop.f32.mrf.mxu0
        %v556 = vadd.f32 %v297, %v555
        %v557 = vpop.f32.mrf.mxu0
        %558 = vmatprep.mubr.bf16.mxu0 0
        %559 = vmatmul.mubr.bf16.gmra.mxu0 %v422
        %v560 = vpop.f32.mrf.mxu0
        %v561 = vadd.f32 %v297, %v560
        %v562 = vpop.f32.mrf.mxu0
        %v563 = vpop.f32.mrf.mxu0
        %v564 = vadd.f32 %v297, %v563
        %v565 = vpop.f32.mrf.mxu0
        %566 = vmatprep.mubr.bf16.mxu0 0
        %567 = vmatmul.mubr.bf16.gmra.mxu0 %v425
        %v568 = vpop.f32.mrf.mxu0
        %v569 = vadd.f32 %v297, %v568
        %v570 = vpop.f32.mrf.mxu0
        %v571 = vpop.f32.mrf.mxu0
        %v572 = vadd.f32 %v297, %v571
        %v573 = vpop.f32.mrf.mxu0
        %574 = vmatprep.mubr.bf16.mxu0 0
        %575 = vmatmul.mubr.bf16.gmra.mxu0 %v428
        %v576 = vpop.f32.mrf.mxu0
        %v577 = vadd.f32 %v297, %v576
        %v578 = vpop.f32.mrf.mxu0
        %v579 = vpop.f32.mrf.mxu0
        %v580 = vadd.f32 %v297, %v579
        %v581 = vpop.f32.mrf.mxu0
        %582 = vmatprep.mubr.bf16.mxu0 0
        %583 = vmatmul.mubr.bf16.gmra.mxu0 %v431
        %v584 = vpop.f32.mrf.mxu0
        %v585 = vadd.f32 %v297, %v584
        %v586 = vpop.f32.mrf.mxu0
        %v587 = vpop.f32.mrf.mxu0
        %v588 = vadd.f32 %v297, %v587
        %v589 = vpop.f32.mrf.mxu0
        %590 = vmatprep.mubr.bf16.mxu0 0
        %591 = vmatmul.mubr.bf16.gmra.mxu0 %v434
        %v592 = vpop.f32.mrf.mxu0
        %v593 = vadd.f32 %v297, %v592
        %v594 = vpop.f32.mrf.mxu0
        %v595 = vpop.f32.mrf.mxu0
        %v596 = vadd.f32 %v297, %v595
        %v597 = vpop.f32.mrf.mxu0
        %598 = vmatprep.mubr.bf16.mxu0 0
        %599 = vmatmul.mubr.bf16.gmra.mxu0 %v437
        %v600 = vpop.f32.mrf.mxu0
        %v601 = vadd.f32 %v297, %v600
        %v602 = vpop.f32.mrf.mxu0
        %v603 = vpop.f32.mrf.mxu0
        %v604 = vadd.f32 %v297, %v603
        %v605 = vpop.f32.mrf.mxu0
        %606 = vdwg.mxu0
        %v607 = vxor.u32 %v481, 2147483648
        %v608 = vxor.u32 %v484, 2147483648
        %v609 = vxor.u32 %v489, 2147483648
        %v610 = vxor.u32 %v492, 2147483648
        %v611 = vxor.u32 %v497, 2147483648
        %v612 = vxor.u32 %v500, 2147483648
        %v613 = vxor.u32 %v505, 2147483648
        %v614 = vxor.u32 %v508, 2147483648
        %v615 = vxor.u32 %v513, 2147483648
        %v616 = vxor.u32 %v516, 2147483648
        %v617 = vxor.u32 %v521, 2147483648
        %v618 = vxor.u32 %v524, 2147483648
        %v619 = vxor.u32 %v529, 2147483648
        %v620 = vxor.u32 %v532, 2147483648
        %v621 = vxor.u32 %v537, 2147483648
        %v622 = vxor.u32 %v540, 2147483648
        %v623 = vxor.u32 %v545, 2147483648
        %v624 = vxor.u32 %v548, 2147483648
        %v625 = vxor.u32 %v553, 2147483648
        %v626 = vxor.u32 %v556, 2147483648
        %v627 = vxor.u32 %v561, 2147483648
        %v628 = vxor.u32 %v564, 2147483648
        %v629 = vxor.u32 %v569, 2147483648
        %v630 = vxor.u32 %v572, 2147483648
        %v631 = vxor.u32 %v577, 2147483648
        %v632 = vxor.u32 %v580, 2147483648
        %v633 = vxor.u32 %v585, 2147483648
        %v634 = vxor.u32 %v588, 2147483648
        %v635 = vxor.u32 %v593, 2147483648
        %v636 = vxor.u32 %v596, 2147483648
        %v637 = vxor.u32 %v601, 2147483648
        %v638 = vxor.u32 %v604, 2147483648
        %v639 = vmul.f32 %v607, 1.442695
        %v640 = vpow.pop %v639
        %v641 = vmul.f32 %v608, 1.442695
        %v642 = vpow.pop %v641
        %v643 = vmul.f32 %v609, 1.442695
        %v644 = vpow.pop %v643
        %v645 = vmul.f32 %v610, 1.442695
        %v646 = vpow.pop %v645
        %v647 = vmul.f32 %v611, 1.442695
        %v648 = vpow.pop %v647
        %v649 = vmul.f32 %v612, 1.442695
        %v650 = vpow.pop %v649
        %v651 = vmul.f32 %v613, 1.442695
        %v652 = vpow.pop %v651
        %v653 = vmul.f32 %v614, 1.442695
        %v654 = vpow.pop %v653
        %v655 = vmul.f32 %v615, 1.442695
        %v656 = vpow.pop %v655
        %v657 = vmul.f32 %v616, 1.442695
        %v658 = vpow.pop %v657
        %v659 = vmul.f32 %v617, 1.442695
        %v660 = vpow.pop %v659
        %v661 = vmul.f32 %v618, 1.442695
        %v662 = vpow.pop %v661
        %v663 = vmul.f32 %v619, 1.442695
        %v664 = vpow.pop %v663
        %v665 = vmul.f32 %v620, 1.442695
        %v666 = vpow.pop %v665
        %v667 = vmul.f32 %v621, 1.442695
        %v668 = vpow.pop %v667
        %v669 = vmul.f32 %v622, 1.442695
        %v670 = vpow.pop %v669
        %v671 = vmul.f32 %v623, 1.442695
        %v672 = vpow.pop %v671
        %v673 = vmul.f32 %v624, 1.442695
        %v674 = vpow.pop %v673
        %v675 = vmul.f32 %v625, 1.442695
        %v676 = vpow.pop %v675
        %v677 = vmul.f32 %v626, 1.442695
        %v678 = vpow.pop %v677
        %v679 = vmul.f32 %v627, 1.442695
        %v680 = vpow.pop %v679
        %v681 = vmul.f32 %v628, 1.442695
        %v682 = vpow.pop %v681
        %v683 = vmul.f32 %v629, 1.442695
        %v684 = vpow.pop %v683
        %v685 = vmul.f32 %v630, 1.442695
        %v686 = vpow.pop %v685
        %v687 = vmul.f32 %v631, 1.442695
        %v688 = vpow.pop %v687
        %v689 = vmul.f32 %v632, 1.442695
        %v690 = vpow.pop %v689
        %v691 = vmul.f32 %v633, 1.442695
        %v692 = vpow.pop %v691
        %v693 = vmul.f32 %v634, 1.442695
        %v694 = vpow.pop %v693
        %v695 = vmul.f32 %v635, 1.442695
        %v696 = vpow.pop %v695
        %v697 = vmul.f32 %v636, 1.442695
        %v698 = vpow.pop %v697
        %v699 = vmul.f32 %v637, 1.442695
        %v700 = vpow.pop %v699
        %v701 = vmul.f32 %v638, 1.442695
        %v702 = vpow.pop %v701
        %v703 = vadd.f32 %v640, 1.0
        %v704 = vadd.f32 %v642, 1.0
        %v705 = vadd.f32 %v644, 1.0
        %v706 = vadd.f32 %v646, 1.0
        %v707 = vadd.f32 %v648, 1.0
        %v708 = vadd.f32 %v650, 1.0
        %v709 = vadd.f32 %v652, 1.0
        %v710 = vadd.f32 %v654, 1.0
        %v711 = vadd.f32 %v656, 1.0
        %v712 = vadd.f32 %v658, 1.0
        %v713 = vadd.f32 %v660, 1.0
        %v714 = vadd.f32 %v662, 1.0
        %v715 = vadd.f32 %v664, 1.0
        %v716 = vadd.f32 %v666, 1.0
        %v717 = vadd.f32 %v668, 1.0
        %v718 = vadd.f32 %v670, 1.0
        %v719 = vadd.f32 %v672, 1.0
        %v720 = vadd.f32 %v674, 1.0
        %v721 = vadd.f32 %v676, 1.0
        %v722 = vadd.f32 %v678, 1.0
        %v723 = vadd.f32 %v680, 1.0
        %v724 = vadd.f32 %v682, 1.0
        %v725 = vadd.f32 %v684, 1.0
        %v726 = vadd.f32 %v686, 1.0
        %v727 = vadd.f32 %v688, 1.0
        %v728 = vadd.f32 %v690, 1.0
        %v729 = vadd.f32 %v692, 1.0
        %v730 = vadd.f32 %v694, 1.0
        %v731 = vadd.f32 %v696, 1.0
        %v732 = vadd.f32 %v698, 1.0
        %v733 = vadd.f32 %v700, 1.0
        %v734 = vadd.f32 %v702, 1.0
        %v735 = vrcp.pop %v703
        %v736 = vmul.f32 1.0, %v735
        %v737 = vrcp.pop %v704
        %v738 = vmul.f32 1.0, %v737
        %v739 = vrcp.pop %v705
        %v740 = vmul.f32 1.0, %v739
        %v741 = vrcp.pop %v706
        %v742 = vmul.f32 1.0, %v741
        %v743 = vrcp.pop %v707
        %v744 = vmul.f32 1.0, %v743
        %v745 = vrcp.pop %v708
        %v746 = vmul.f32 1.0, %v745
        %v747 = vrcp.pop %v709
        %v748 = vmul.f32 1.0, %v747
        %v749 = vrcp.pop %v710
        %v750 = vmul.f32 1.0, %v749
        %v751 = vrcp.pop %v711
        %v752 = vmul.f32 1.0, %v751
        %v753 = vrcp.pop %v712
        %v754 = vmul.f32 1.0, %v753
        %v755 = vrcp.pop %v713
        %v756 = vmul.f32 1.0, %v755
        %v757 = vrcp.pop %v714
        %v758 = vmul.f32 1.0, %v757
        %v759 = vrcp.pop %v715
        %v760 = vmul.f32 1.0, %v759
        %v761 = vrcp.pop %v716
        %v762 = vmul.f32 1.0, %v761
        %v763 = vrcp.pop %v717
        %v764 = vmul.f32 1.0, %v763
        %v765 = vrcp.pop %v718
        %v766 = vmul.f32 1.0, %v765
        %v767 = vrcp.pop %v719
        %v768 = vmul.f32 1.0, %v767
        %v769 = vrcp.pop %v720
        %v770 = vmul.f32 1.0, %v769
        %v771 = vrcp.pop %v721
        %v772 = vmul.f32 1.0, %v771
        %v773 = vrcp.pop %v722
        %v774 = vmul.f32 1.0, %v773
        %v775 = vrcp.pop %v723
        %v776 = vmul.f32 1.0, %v775
        %v777 = vrcp.pop %v724
        %v778 = vmul.f32 1.0, %v777
        %v779 = vrcp.pop %v725
        %v780 = vmul.f32 1.0, %v779
        %v781 = vrcp.pop %v726
        %v782 = vmul.f32 1.0, %v781
        %v783 = vrcp.pop %v727
        %v784 = vmul.f32 1.0, %v783
        %v785 = vrcp.pop %v728
        %v786 = vmul.f32 1.0, %v785
        %v787 = vrcp.pop %v729
        %v788 = vmul.f32 1.0, %v787
        %v789 = vrcp.pop %v730
        %v790 = vmul.f32 1.0, %v789
        %v791 = vrcp.pop %v731
        %v792 = vmul.f32 1.0, %v791
        %v793 = vrcp.pop %v732
        %v794 = vmul.f32 1.0, %v793
        %v795 = vrcp.pop %v733
        %v796 = vmul.f32 1.0, %v795
        %v797 = vrcp.pop %v734
        %v798 = vmul.f32 1.0, %v797
        %v799 = vmul.f32 %v481, %v736
        %v800 = vmul.f32 %v484, %v738
        %v801 = vmul.f32 %v489, %v740
        %v802 = vmul.f32 %v492, %v742
        %v803 = vmul.f32 %v497, %v744
        %v804 = vmul.f32 %v500, %v746
        %v805 = vmul.f32 %v505, %v748
        %v806 = vmul.f32 %v508, %v750
        %v807 = vmul.f32 %v513, %v752
        %v808 = vmul.f32 %v516, %v754
        %v809 = vmul.f32 %v521, %v756
        %v810 = vmul.f32 %v524, %v758
        %v811 = vmul.f32 %v529, %v760
        %v812 = vmul.f32 %v532, %v762
        %v813 = vmul.f32 %v537, %v764
        %v814 = vmul.f32 %v540, %v766
        %v815 = vmul.f32 %v545, %v768
        %v816 = vmul.f32 %v548, %v770
        %v817 = vmul.f32 %v553, %v772
        %v818 = vmul.f32 %v556, %v774
        %v819 = vmul.f32 %v561, %v776
        %v820 = vmul.f32 %v564, %v778
        %v821 = vmul.f32 %v569, %v780
        %v822 = vmul.f32 %v572, %v782
        %v823 = vmul.f32 %v577, %v784
        %v824 = vmul.f32 %v580, %v786
        %v825 = vmul.f32 %v585, %v788
        %v826 = vmul.f32 %v588, %v790
        %v827 = vmul.f32 %v593, %v792
        %v828 = vmul.f32 %v596, %v794
        %v829 = vmul.f32 %v601, %v796
        %v830 = vmul.f32 %v604, %v798
        %s831 = smul.u32 %s24, 256
        %v832 = vlaneseq
        %v833 = vshrl.u32 %v832, 7
        %v834 = vadd.s32 %v833, 8
        %v835 = vadd.s32 %v833, 16
        %v836 = vadd.s32 %v833, 24
        %v837 = vadd.s32 %v833, 32
        %v838 = vadd.s32 %v833, 40
        %v839 = vadd.s32 %v833, 48
        %v840 = vadd.s32 %v833, 56
        %v841 = vadd.s32 %v833, 64
        %v842 = vadd.s32 %v833, 72
        %v843 = vadd.s32 %v833, 80
        %v844 = vadd.s32 %v833, 88
        %v845 = vadd.s32 %v833, 96
        %v846 = vadd.s32 %v833, 104
        %v847 = vadd.s32 %v833, 112
        %v848 = vadd.s32 %v833, 120
        %v849 = vadd.s32 %v833, 128
        %v850 = vadd.s32 %v833, 136
        %v851 = vadd.s32 %v833, 144
        %v852 = vadd.s32 %v833, 152
        %v853 = vadd.s32 %v833, 160
        %v854 = vadd.s32 %v833, 168
        %v855 = vadd.s32 %v833, 176
        %v856 = vadd.s32 %v833, 184
        %v857 = vadd.s32 %v833, 192
        %v858 = vadd.s32 %v833, 200
        %v859 = vadd.s32 %v833, 208
        %v860 = vadd.s32 %v833, 216
        %v861 = vadd.s32 %v833, 224
        %v862 = vadd.s32 %v833, 232
        %v863 = vadd.s32 %v833, 240
        %v864 = vadd.s32 %v833, 248
        %v865 = vstv %s831
        %v866 = vadd.s32 %v865, %v833
        %v867 = vadd.s32 %v865, %v834
        %v868 = vadd.s32 %v865, %v835
        %v869 = vadd.s32 %v865, %v836
        %v870 = vadd.s32 %v865, %v837
        %v871 = vadd.s32 %v865, %v838
        %v872 = vadd.s32 %v865, %v839
        %v873 = vadd.s32 %v865, %v840
        %v874 = vadd.s32 %v865, %v841
        %v875 = vadd.s32 %v865, %v842
        %v876 = vadd.s32 %v865, %v843
        %v877 = vadd.s32 %v865, %v844
        %v878 = vadd.s32 %v865, %v845
        %v879 = vadd.s32 %v865, %v846
        %v880 = vadd.s32 %v865, %v847
        %v881 = vadd.s32 %v865, %v848
        %v882 = vadd.s32 %v865, %v849
        %v883 = vadd.s32 %v865, %v850
        %v884 = vadd.s32 %v865, %v851
        %v885 = vadd.s32 %v865, %v852
        %v886 = vadd.s32 %v865, %v853
        %v887 = vadd.s32 %v865, %v854
        %v888 = vadd.s32 %v865, %v855
        %v889 = vadd.s32 %v865, %v856
        %v890 = vadd.s32 %v865, %v857
        %v891 = vadd.s32 %v865, %v858
        %v892 = vadd.s32 %v865, %v859
        %v893 = vadd.s32 %v865, %v860
        %v894 = vadd.s32 %v865, %v861
        %v895 = vadd.s32 %v865, %v862
        %v896 = vadd.s32 %v865, %v863
        %v897 = vadd.s32 %v865, %v864
        %vm898 = vcmp.lt.s32.totalorder %v866, 192
        %vm899 = vcmp.lt.s32.totalorder %v867, 192
        %vm900 = vcmp.lt.s32.totalorder %v868, 192
        %vm901 = vcmp.lt.s32.totalorder %v869, 192
        %vm902 = vcmp.lt.s32.totalorder %v870, 192
        %vm903 = vcmp.lt.s32.totalorder %v871, 192
        %vm904 = vcmp.lt.s32.totalorder %v872, 192
        %vm905 = vcmp.lt.s32.totalorder %v873, 192
        %vm906 = vcmp.lt.s32.totalorder %v874, 192
        %vm907 = vcmp.lt.s32.totalorder %v875, 192
        %vm908 = vcmp.lt.s32.totalorder %v876, 192
        %vm909 = vcmp.lt.s32.totalorder %v877, 192
        %vm910 = vcmp.lt.s32.totalorder %v878, 192
        %vm911 = vcmp.lt.s32.totalorder %v879, 192
        %vm912 = vcmp.lt.s32.totalorder %v880, 192
        %vm913 = vcmp.lt.s32.totalorder %v881, 192
        %vm914 = vcmp.lt.s32.totalorder %v882, 192
        %vm915 = vcmp.lt.s32.totalorder %v883, 192
        %vm916 = vcmp.lt.s32.totalorder %v884, 192
        %vm917 = vcmp.lt.s32.totalorder %v885, 192
        %vm918 = vcmp.lt.s32.totalorder %v886, 192
        %vm919 = vcmp.lt.s32.totalorder %v887, 192
        %vm920 = vcmp.lt.s32.totalorder %v888, 192
        %vm921 = vcmp.lt.s32.totalorder %v889, 192
        %vm922 = vcmp.lt.s32.totalorder %v890, 192
        %vm923 = vcmp.lt.s32.totalorder %v891, 192
        %vm924 = vcmp.lt.s32.totalorder %v892, 192
        %vm925 = vcmp.lt.s32.totalorder %v893, 192
        %vm926 = vcmp.lt.s32.totalorder %v894, 192
        %vm927 = vcmp.lt.s32.totalorder %v895, 192
        %vm928 = vcmp.lt.s32.totalorder %v896, 192
        %vm929 = vcmp.lt.s32.totalorder %v897, 192
        %v930 = vsel %vm898, %v799, 0.0
        %v931 = vsel %vm899, %v800, 0.0
        %v932 = vsel %vm900, %v801, 0.0
        %v933 = vsel %vm901, %v802, 0.0
        %v934 = vsel %vm902, %v803, 0.0
        %v935 = vsel %vm903, %v804, 0.0
        %v936 = vsel %vm904, %v805, 0.0
        %v937 = vsel %vm905, %v806, 0.0
        %v938 = vsel %vm906, %v807, 0.0
        %v939 = vsel %vm907, %v808, 0.0
        %v940 = vsel %vm908, %v809, 0.0
        %v941 = vsel %vm909, %v810, 0.0
        %v942 = vsel %vm910, %v811, 0.0
        %v943 = vsel %vm911, %v812, 0.0
        %v944 = vsel %vm912, %v813, 0.0
        %v945 = vsel %vm913, %v814, 0.0
        %v946 = vsel %vm914, %v815, 0.0
        %v947 = vsel %vm915, %v816, 0.0
        %v948 = vsel %vm916, %v817, 0.0
        %v949 = vsel %vm917, %v818, 0.0
        %v950 = vsel %vm918, %v819, 0.0
        %v951 = vsel %vm919, %v820, 0.0
        %v952 = vsel %vm920, %v821, 0.0
        %v953 = vsel %vm921, %v822, 0.0
        %v954 = vsel %vm922, %v823, 0.0
        %v955 = vsel %vm923, %v824, 0.0
        %v956 = vsel %vm924, %v825, 0.0
        %v957 = vsel %vm925, %v826, 0.0
        %v958 = vsel %vm926, %v827, 0.0
        %v959 = vsel %vm927, %v828, 0.0
        %v960 = vsel %vm928, %v829, 0.0
        %v961 = vsel %vm929, %v830, 0.0
        %v962 = vld [vmem:[#allocation2] sm:$0x1]
        %v963 = vadd.f32 %v930, %v931
        %v964 = vadd.f32 %v963, %v932
        %v965 = vadd.f32 %v964, %v933
        %v966 = vadd.f32 %v965, %v934
        %v967 = vadd.f32 %v966, %v935
        %v968 = vadd.f32 %v967, %v936
        %v969 = vadd.f32 %v968, %v937
        %v970 = vadd.f32 %v969, %v938
        %v971 = vadd.f32 %v970, %v939
        %v972 = vadd.f32 %v971, %v940
        %v973 = vadd.f32 %v972, %v941
        %v974 = vadd.f32 %v973, %v942
        %v975 = vadd.f32 %v974, %v943
        %v976 = vadd.f32 %v975, %v944
        %v977 = vadd.f32 %v976, %v945
        %v978 = vadd.f32 %v977, %v946
        %v979 = vadd.f32 %v978, %v947
        %v980 = vadd.f32 %v979, %v948
        %v981 = vadd.f32 %v980, %v949
        %v982 = vadd.f32 %v981, %v950
        %v983 = vadd.f32 %v982, %v951
        %v984 = vadd.f32 %v983, %v952
        %v985 = vadd.f32 %v984, %v953
        %v986 = vadd.f32 %v985, %v954
        %v987 = vadd.f32 %v986, %v955
        %v988 = vadd.f32 %v987, %v956
        %v989 = vadd.f32 %v988, %v957
        %v990 = vadd.f32 %v989, %v958
        %v991 = vadd.f32 %v990, %v959
        %v992 = vadd.f32 %v991, %v960
        %v993 = vadd.f32 %v992, %v961
        %v994 = vrot.slane %v993, 4
        %v995 = vadd.f32 %v993, %v994
        %v996 = vrot.slane %v995, 2
        %v997 = vadd.f32 %v995, %v996
        %v998 = vrot.slane %v997, 1
        %v999 = vadd.f32 %v997, %v998
        %v1000 = vadd.f32 %v962, %v999
        %1001 = vst [vmem:[#allocation2] sm:$0x1] %v1000
        // Predicated region
        $region45: #{palm_recognizer_forward.1} parent=39 // pred_check
          %p1002 = pneg %p251
        $region46: #{palm_recognizer_forward.1} parent=39 // pred_check_branch
          %1004 = sbr.rel (%p1002) target = $region48
        $region47: #{palm_recognizer_forward.1} parent=39 // pred_region
          %v1005 = vld [vmem:[#allocation2] sm:$0x1]
          %v1006 = vmul.f32 %v1005, 0.0052083335
          %v1007 = vld [vmem:[%s3] sm:$0xff]
          %v1008 = vld [vmem:[%s3 + $0x8] sm:$0xff]
          %v1009 = vld [vmem:[%s3 + $0x10] sm:$0xff]
          %v1010 = vld [vmem:[%s3 + $0x18] sm:$0xff]
          %v1011 = vld [vmem:[%s3 + $0x20] sm:$0xff]
          %v1012 = vld [vmem:[%s3 + $0x28] sm:$0xff]
          %v1013 = vld [vmem:[%s3 + $0x30] sm:$0xff]
          %v1014 = vld [vmem:[%s3 + $0x38] sm:$0xff]
          %v1015 = vld [vmem:[%s3 + $0x40] sm:$0xff]
          %v1016 = vld [vmem:[%s3 + $0x48] sm:$0xff]
          %v1017 = vld [vmem:[%s3 + $0x50] sm:$0xff]
          %v1018 = vld [vmem:[%s3 + $0x58] sm:$0xff]
          %v1019 = vld [vmem:[%s3 + $0x60] sm:$0xff]
          %v1020 = vld [vmem:[%s3 + $0x68] sm:$0xff]
          %v1021 = vld [vmem:[%s3 + $0x70] sm:$0xff]
          %v1022 = vld [vmem:[%s3 + $0x78] sm:$0xff]
          %v1023 = vld [vmem:[%s4] sm:$0x1]
          %1024 = vmatprep.subr.mxu0 0.0
          %1025 = vmatpush1.msra.mxu0 %v1022
          %1026 = vmatprep.subr.mxu0 0.0
          %1027 = vmatpush1.msra.mxu0 %v1021
          %1028 = vmatprep.subr.mxu0 0.0
          %1029 = vmatpush1.msra.mxu0 %v1020
          %1030 = vmatprep.subr.mxu0 0.0
          %1031 = vmatpush1.msra.mxu0 %v1019
          %1032 = vmatprep.subr.mxu0 0.0
          %1033 = vmatpush1.msra.mxu0 %v1018
          %1034 = vmatprep.subr.mxu0 0.0
          %1035 = vmatpush1.msra.mxu0 %v1017
          %1036 = vmatprep.subr.mxu0 0.0
          %1037 = vmatpush1.msra.mxu0 %v1016
          %1038 = vmatprep.subr.mxu0 0.0
          %1039 = vmatpush1.msra.mxu0 %v1015
          %1040 = vmatprep.subr.mxu0 0.0
          %1041 = vmatpush1.msra.mxu0 %v1014
          %1042 = vmatprep.subr.mxu0 0.0
          %1043 = vmatpush1.msra.mxu0 %v1013
          %1044 = vmatprep.subr.mxu0 0.0
          %1045 = vmatpush1.msra.mxu0 %v1012
          %1046 = vmatprep.subr.mxu0 0.0
          %1047 = vmatpush1.msra.mxu0 %v1011
          %1048 = vmatprep.subr.mxu0 0.0
          %1049 = vmatpush1.msra.mxu0 %v1010
          %1050 = vmatprep.subr.mxu0 0.0
          %1051 = vmatpush1.msra.mxu0 %v1009
          %1052 = vmatprep.subr.mxu0 0.0
          %1053 = vmatpush1.msra.mxu0 %v1008
          %1054 = vmatprep.subr.mxu0 0.0
          %1055 = vmatpush1.msra.mxu0 %v1007
          %1056 = vmatprep.subr.mxu0 0.0
          %1057 = vmatpush2.msra.mxu0 0.0
          %1058 = vmatprep.subr.mxu0 0.0
          %1059 = vmatpush2.msra.mxu0 0.0
          %1060 = vmatprep.subr.mxu0 0.0
          %1061 = vmatpush2.msra.mxu0 0.0
          %1062 = vmatprep.subr.mxu0 0.0
          %1063 = vmatpush2.msra.mxu0 0.0
          %1064 = vmatprep.subr.mxu0 0.0
          %1065 = vmatpush2.msra.mxu0 0.0
          %1066 = vmatprep.subr.mxu0 0.0
          %1067 = vmatpush2.msra.mxu0 0.0
          %1068 = vmatprep.subr.mxu0 0.0
          %1069 = vmatpush2.msra.mxu0 0.0
          %1070 = vmatprep.subr.mxu0 0.0
          %1071 = vmatpush2.msra.mxu0 0.0
          %1072 = vmatprep.subr.mxu0 0.0
          %1073 = vmatpush2.msra.mxu0 0.0
          %1074 = vmatprep.subr.mxu0 0.0
          %1075 = vmatpush2.msra.mxu0 0.0
          %1076 = vmatprep.subr.mxu0 0.0
          %1077 = vmatpush2.msra.mxu0 0.0
          %1078 = vmatprep.subr.mxu0 0.0
          %1079 = vmatpush2.msra.mxu0 0.0
          %1080 = vmatprep.subr.mxu0 0.0
          %1081 = vmatpush2.msra.mxu0 0.0
          %1082 = vmatprep.subr.mxu0 0.0
          %1083 = vmatpush2.msra.mxu0 0.0
          %1084 = vmatprep.subr.mxu0 0.0
          %1085 = vmatpush2.msra.mxu0 0.0
          %1086 = vmatprep.subr.mxu0 0.0
          %1087 = vmatpush2.msra.mxu0 0.0
          %1088 = vmatprep.mubr.f32.mxu0 0.0
          %1089 = vmatmul.mubr.f32.gmra.mxu0 %v1006
          %v1090 = vpop.f32.mrf.mxu0
          %v1091 = vadd.f32 %v1023, %v1090
          %v1092 = vpop.f32.mrf.mxu0
          %1093 = vdwg.mxu0
          %v1094 = vxor.u32 %v1091, 2147483648
          %v1095 = vmul.f32 %v1094, 1.442695
          %v1096 = vpow.pop %v1095
          %v1097 = vadd.f32 %v1096, 1.0
          %v1098 = vrcp.pop %v1097
          %v1099 = vmul.f32 1.0, %v1098
          %1100 = vst [vmem:[%s239] sm:$0x1] %v1099
        $region48: #{palm_recognizer_forward.1} parent=39 // pred_fallthru
          _
        %s1101 = sand.u32 %s151, 1
        %s1102 = scalar_lea.sflag [#allocation4], %s1101
        %s1103 = sand.u32 %s151, 1
        %s1104 = scalar_lea.vmem [#allocation3], %s1103
        // Predicated region
        $region49: #{palm_recognizer_forward.1} parent=39 // pred_check
          %p1105 = pneg %p161
        $region50: #{palm_recognizer_forward.1} parent=39 // pred_check_branch
          %1107 = sbr.rel (%p1105) target = $region52
        $region51: #{palm_recognizer_forward.1} parent=39 // pred_region
          %s1109 = ssub.s32 16, 16
          %1110 = vsyncadd %s1102, %s1109
          %s1111 = smul.addr %s23, 16
          %s1112 = scalar_lea.hbm %s5, %s1111
          %s1114 = sshll.u32 %s1104, 4
          %s1115 = int_to_ptr.vmem [resolvable:$true] %s1114
          %1117 = dma.vmem_to_hbm [thread:$0]  %s1115, 16, %s1112, %s1102
        $region52: #{palm_recognizer_forward.1} parent=39 // pred_fallthru
          _
      $region40: #{palm_recognizer_forward.1} parent=5 // pred_fallthru
        _
      %p1118 = scmp.le.s32.totalorder 2, %s14
      // Predicated region
      $region53: #{palm_recognizer_forward.1} parent=5 // pred_check
        %p1119 = pneg %p1118
      $region54: #{palm_recognizer_forward.1} parent=5 // pred_check_branch
        %1121 = sbr.rel (%p1119) target = $region56
      $region55: #{palm_recognizer_forward.1} parent=5 // pred_region
        %s1122 = ssub.s32 %s14, 2
        // Predicated region
        $region57: #{palm_recognizer_forward.1} parent=55 // pred_check
          %p1123 = pneg %p167
        $region58: #{palm_recognizer_forward.1} parent=55 // pred_check_branch
          %1125 = sbr.rel (%p1123) target = $region60
        $region59: #{palm_recognizer_forward.1} parent=55 // pred_region
          %s1126 = sand.u32 %s152, 1
          %s1127 = scalar_lea.sflag [#allocation4], %s1126
          %s1128 = sand.u32 %s152, 1
          %s1129 = scalar_lea.vmem [#allocation3], %s1128
          %1130 = dma.done %s1127, 16
        $region60: #{palm_recognizer_forward.1} parent=55 // pred_fallthru
          _
      $region56: #{palm_recognizer_forward.1} parent=5 // pred_fallthru
        _
    $region6: #{palm_recognizer_forward.1} parent=1 // loop_footer
      %s18 = sadd.s32 1, %s14
    $region7: #{palm_recognizer_forward.1} parent=1 // loop_footer_branch
      %13 = sbr.rel target = $region3
    $region8: #{palm_recognizer_forward.1} parent=1 // loop_exit
      _
    %1131 = vsyncpa [#allocation4], 1
    %s1132 = scalar_lea.sflag [#allocation4], 1
    %1133 = vsyncpa %s1132, 1

</llo_original>
